<compile_context>
chip_gen: v7x
topology: tpu7x:2x2x1
jax: 0.10.0
libtpu: 0.0.40
codegen_flags: <defaults>
</compile_context>

<pallas_src>
import functools

import jax
import jax.numpy as jnp
from jax import lax
from jax.experimental import pallas as pl
from jax.experimental.pallas import tpu as pltpu


def _round_up(x, m):
    return (x + m - 1) // m * m


def _sae_kernel(x_ref, wt_ref, b_ref, inv_ref, d_ref, s_ref, xr_ref, *,
                relu, scale_s):
    """One (batch-tile i, dictionary-row-tile j) grid step.

    x_ref  : (TB, Mp)  input tile                 (compute dtype)
    wt_ref : (Mp, TN)  encoder weight slice W.T   (compute dtype)
    b_ref  : (1,  TN)  encoder bias slice         (f32)
    inv_ref: (1,  TN)  1/||D_row|| slice          (f32, zeros in padded rows)
    d_ref  : (TN, Mp)  dictionary slice           (compute dtype)
    s_ref  : (TB, TN)  S_ output tile
    xr_ref : (TB, Mp)  X_ output tile, f32, VMEM-resident accumulator across j
    """
    j = pl.program_id(1)

    @pl.when(j == 0)
    def _():
        xr_ref[...] = jnp.zeros_like(xr_ref)

    # Encoder tile: pre = X @ W.T + b (f32 MXU accumulation, f32 bias/act).
    pre = jnp.dot(x_ref[...], wt_ref[...],
                  preferred_element_type=jnp.float32) + b_ref[...]
    s = jnp.maximum(pre, 0.0) if relu else jnp.exp(pre)
    s_ref[...] = s.astype(s_ref.dtype)

    # Decoder tile: S @ normalize(D) == (S * inv_norm) @ D.  Scaling the small
    # S tile is cheap VPU work and replaces the old per-step XLU row-norm.
    if scale_s:
        s = s * inv_ref[...]
    xr_ref[...] += jnp.dot(s.astype(d_ref.dtype), d_ref[...],
                           preferred_element_type=jnp.float32)


def _vmem_budget_and_limit():
    """Generation-aware tile-picking budget + explicit scoped-VMEM limit."""
    try:
        cap = int(pltpu.get_tpu_info().vmem_capacity_bytes)
    except Exception:
        cap = 64 * 1024 * 1024          # conservative fallback (v7x: 64 MiB/TC)
    budget = int(cap * 0.70)            # headroom for compiler internal scratch
    limit = int(cap * 0.90)             # passed to CompilerParams
    return budget, limit


def _pick_tiles(Bp, Mp, Np, in_itemsize, s_itemsize, budget):
    """Largest (tile_b, tile_n) whose double-buffered footprint fits `budget`.

    tile_b is swept first (it controls how often W/D are re-streamed from
    HBM), then tile_n (prefer >=256 to fill the 256x256 MXUs on v6e/v7x).
    """
    def footprint(tb, tn):
        return (2 * tb * Mp * in_itemsize      # X tile        (double-buffered)
                + 2 * Mp * tn * in_itemsize    # W.T slice
                + 2 * tn * Mp * in_itemsize    # D slice
                + 4 * tn * 4                   # bias + inv_norm slices (f32)
                + 2 * tb * tn * s_itemsize     # S_ output tile
                + 2 * tb * Mp * 4)             # X_ output tile (f32 accumulator)

    b_cands = sorted({c for c in (1024, 768, 512, 384, 256, 192, 128, 64, 32,
                                  16, Bp) if 16 <= c <= min(Bp, 1024)},
                     reverse=True) or [Bp]
    n_cands = sorted({c for c in (2048, 1536, 1024, 768, 512, 256, 128, Np)
                      if 128 <= c <= min(Np, 2048)}, reverse=True) or [Np]
    n_min = 256 if Np >= 256 else n_cands[-1]

    for tb in b_cands:
        if footprint(tb, n_min) > budget:
            continue
        for tn in n_cands:
            if footprint(tb, tn) <= budget:
                return tb, tn
    return b_cands[-1], n_cands[-1]


def sae_forward(x, w, b, d, *, learn_D=True, relu=True,
                compute_dtype=jnp.bfloat16, s_dtype=jnp.float32,
                tile_b=None, tile_n=None):
    """Pallas forward of SparseAutoEncoder.  Returns (S_, X_).

    X / W / D are streamed in `compute_dtype` (default bf16) with f32 MXU
    accumulation.  S_ has dtype `s_dtype`; X_ is float32.
    """
    B, M = x.shape
    N, M2 = w.shape
    assert M == M2 and d.shape == (N, M) and b.shape == (N,)

    in_itemsize = jnp.dtype(compute_dtype).itemsize
    s_itemsize = jnp.dtype(s_dtype).itemsize
    Mp = _round_up(M, 128)     # lane-dense last dims
    Np = _round_up(N, 128)
    Bp = _round_up(B, 16)      # sublane-safe also for bf16

    budget, vmem_limit = _vmem_budget_and_limit()
    auto_b, auto_n = _pick_tiles(Bp, Mp, Np, in_itemsize, s_itemsize, budget)
    tile_b = auto_b if tile_b is None else tile_b
    tile_n = auto_n if tile_n is None else tile_n
    Bp = _round_up(Bp, tile_b)
    Np = _round_up(Np, tile_n)

    # One-time wrapper-side layout work (outside the sequential grid loop):
    # transpose W, pad to tiled shapes, cast to the streaming dtype.
    xp = jnp.pad(x.astype(compute_dtype), ((0, Bp - B), (0, Mp - M)))
    wt = jnp.pad(w.T.astype(compute_dtype), ((0, Mp - M), (0, Np - N)))
    dp = jnp.pad(d.astype(compute_dtype), ((0, Np - N), (0, Mp - M)))
    bp = jnp.pad(b.astype(jnp.float32).reshape(1, N), ((0, 0), (0, Np - N)))

    # D row-normalization hoisted out of the kernel: one (1, Np) f32 vector.
    if learn_D:
        sumsq = jnp.sum(d.astype(jnp.float32) ** 2, axis=1)
        # TODO(synk): PyTorch yields inf/nan for zero-norm dictionary rows;
        # this clamp maps their contribution to 0 instead.
        inv = lax.rsqrt(jnp.maximum(sumsq, 1e-30))
    else:
        inv = jnp.ones((N,), jnp.float32)
    invp = jnp.pad(inv.reshape(1, N), ((0, 0), (0, Np - N)))  # padded rows -> 0

    kernel = functools.partial(_sae_kernel, relu=relu, scale_s=learn_D)
    grid = (Bp // tile_b, Np // tile_n)

    s_out, x_out = pl.pallas_call(
        kernel,
        out_shape=(
            jax.ShapeDtypeStruct((Bp, Np), s_dtype),       # S_
            jax.ShapeDtypeStruct((Bp, Mp), jnp.float32),   # X_
        ),
        grid_spec=pltpu.PrefetchScalarGridSpec(
            num_scalar_prefetch=0,
            grid=grid,
            in_specs=[
                pl.BlockSpec((tile_b, Mp), lambda i, j: (i, 0)),    # X tile
                pl.BlockSpec((Mp, tile_n), lambda i, j: (0, j)),    # W.T slice
                pl.BlockSpec((1, tile_n), lambda i, j: (0, j)),     # bias
                pl.BlockSpec((1, tile_n), lambda i, j: (0, j)),     # inv_norm
                pl.BlockSpec((tile_n, Mp), lambda i, j: (j, 0)),    # D slice
            ],
            out_specs=[
                pl.BlockSpec((tile_b, tile_n), lambda i, j: (i, j)),  # S_
                pl.BlockSpec((tile_b, Mp), lambda i, j: (i, 0)),      # X_ (acc)
            ],
        ),
        compiler_params=pltpu.CompilerParams(
            dimension_semantics=("parallel", "arbitrary"),
            vmem_limit_bytes=vmem_limit),
    )(xp, wt, bp, invp, dp)

    return s_out[:B, :N], x_out[:B, :M]


def sae_forward_ref(x, w, b, d, *, learn_D=True, relu=True):
    """Plain-JAX reference mirroring the PyTorch forward."""
    if learn_D:
        d = d / jnp.linalg.norm(d, axis=1, keepdims=True)
    pre = x @ w.T + b
    s = jnp.maximum(pre, 0.0) if relu else jnp.exp(pre)
    return s, s @ d


if __name__ == "__main__":
    # Small shapes implied by the module: X: (B, M), W: (N, M), D: (N, M).
    B, M, N = 16, 32, 64
    key = jax.random.PRNGKey(0)
    kx, kw, kb, kd = jax.random.split(key, 4)

    x = jax.random.normal(kx, (B, M), dtype=jnp.float32)
    w = jax.random.normal(kw, (N, M), dtype=jnp.float32) * (1.0 / jnp.sqrt(M))
    b = jax.random.normal(kb, (N,), dtype=jnp.float32) * 0.1
    d = jax.random.normal(kd, (N, M), dtype=jnp.float32)

    s_gold, x_gold = sae_forward_ref(x, w, b, d, learn_D=True, relu=True)

    # f32-streamed operands: strict check (ReLU path, learned D).
    s_, x_ = sae_forward(x, w, b, d, learn_D=True, relu=True,
                         compute_dtype=jnp.float32)
    jax.block_until_ready((s_, x_))
    assert s_.shape == (B, N) and x_.shape == (B, M)
    assert jnp.allclose(s_, s_gold, atol=1e-3, rtol=1e-3)
    assert jnp.allclose(x_, x_gold, atol=1e-3, rtol=1e-3)

    # Exp encoder path (f32).
    s_e, x_e = sae_forward(x, w, b, d, learn_D=True, relu=False,
                           compute_dtype=jnp.float32)
    jax.block_until_ready((s_e, x_e))
    s_er, x_er = sae_forward_ref(x, w, b, d, learn_D=True, relu=False)
    assert jnp.allclose(s_e, s_er, atol=1e-3, rtol=1e-3)
    assert jnp.allclose(x_e, x_er, atol=1e-3, rtol=1e-3)

    # Fixed dictionary path (learn_D=False), f32.
    s_f, x_f = sae_forward(x, w, b, d, learn_D=False, relu=True,
                           compute_dtype=jnp.float32)
    jax.block_until_ready((s_f, x_f))
    s_fr, x_fr = sae_forward_ref(x, w, b, d, learn_D=False, relu=True)
    assert jnp.allclose(s_f, s_fr, atol=1e-3, rtol=1e-3)
    assert jnp.allclose(x_f, x_fr, atol=1e-3, rtol=1e-3)

    # Default bf16-streamed operands (f32 MXU accumulation): loose check.
    s_b, x_b = sae_forward(x, w, b, d, learn_D=True, relu=True)
    jax.block_until_ready((s_b, x_b))
    assert jnp.allclose(s_b, s_gold, atol=5e-2, rtol=5e-2)
    assert jnp.allclose(x_b, x_gold, atol=5e-2, rtol=5e-2)

    print("KERNEL_OK")
</pallas_src>

<mosaic_0001>
module attributes {stable_mosaic.version = 11 : i64} {
  func.func @_sae_kernel(%arg0: i32, %arg1: i32, %arg2: memref<16x128xf32, #tpu.memory_space<vmem>>, %arg3: memref<128x128xf32, #tpu.memory_space<vmem>>, %arg4: memref<1x128xf32, #tpu.memory_space<vmem>>, %arg5: memref<1x128xf32, #tpu.memory_space<vmem>>, %arg6: memref<128x128xf32, #tpu.memory_space<vmem>>, %arg7: memref<16x128xf32, #tpu.memory_space<vmem>>, %arg8: memref<16x128xf32, #tpu.memory_space<vmem>>) attributes {dimension_semantics = [#tpu.dimension_semantics<parallel>, #tpu.dimension_semantics<arbitrary>], iteration_bounds = array<i64: 1, 1>, scalar_prefetch = 0 : i64, scratch_operands = 0 : i64, tpu.core_type = #tpu.core_type<tc>, window_params = [{transform_indices = @transform_0, window_bounds = array<i64: 16, 128>}, {transform_indices = @transform_1, window_bounds = array<i64: 128, 128>}, {transform_indices = @transform_2, window_bounds = array<i64: 1, 128>}, {transform_indices = @transform_3, window_bounds = array<i64: 1, 128>}, {transform_indices = @transform_4, window_bounds = array<i64: 128, 128>}, {transform_indices = @transform_5, window_bounds = array<i64: 16, 128>}, {transform_indices = @transform_6, window_bounds = array<i64: 16, 128>}]} {
    %c0_i32 = arith.constant 0 : i32
    %0 = arith.cmpi eq, %arg1, %c0_i32 : i32
    %1 = arith.extui %0 : i1 to i32
    %c0_i32_0 = arith.constant 0 : i32
    %2 = arith.cmpi ne, %1, %c0_i32_0 : i32
    scf.if %2 {
      %cst_18 = arith.constant 0.000000e+00 : f32
      %20 = vector.broadcast %cst_18 : f32 to vector<16x128xf32>
      %c0_19 = arith.constant 0 : index
      %c0_20 = arith.constant 0 : index
      %21 = vector.load %arg8[%c0_19, %c0_20] : memref<16x128xf32, #tpu.memory_space<vmem>>, vector<16x128xf32>
      tpu.vector_store %arg8[%c0_19, %c0_20], %20 {strides = array<i32>} : memref<16x128xf32, #tpu.memory_space<vmem>>, vector<16x128xf32>,
    } else {
    }
    %c0 = arith.constant 0 : index
    %c0_1 = arith.constant 0 : index
    %3 = vector.load %arg2[%c0, %c0_1] : memref<16x128xf32, #tpu.memory_space<vmem>>, vector<16x128xf32>
    %c0_2 = arith.constant 0 : index
    %c0_3 = arith.constant 0 : index
    %4 = vector.load %arg3[%c0_2, %c0_3] : memref<128x128xf32, #tpu.memory_space<vmem>>, vector<128x128xf32>
    %cst = arith.constant dense<0.000000e+00> : vector<16x128xf32>
    %5 = tpu.matmul %3, %4, %cst {dimension_numbers = #tpu.dot_dimension_numbers<[1], [0], [0], [1], [0, 0, 1, 1], [], []>} : vector<16x128xf32>, vector<128x128xf32>, vector<16x128xf32> -> vector<16x128xf32>
    %c0_4 = arith.constant 0 : index
    %c0_5 = arith.constant 0 : index
    %6 = vector.load %arg4[%c0_4, %c0_5] : memref<1x128xf32, #tpu.memory_space<vmem>>, vector<1x128xf32>
    %7 = vector.broadcast %6 : vector<1x128xf32> to vector<16x128xf32>
    %8 = arith.addf %5, %7 : vector<16x128xf32>
    %cst_6 = arith.constant 0.000000e+00 : f32
    %9 = vector.broadcast %cst_6 : f32 to vector<16x128xf32>
    %10 = arith.maximumf %8, %9 : vector<16x128xf32>
    %c0_7 = arith.constant 0 : index
    %c0_8 = arith.constant 0 : index
    %11 = vector.load %arg7[%c0_7, %c0_8] : memref<16x128xf32, #tpu.memory_space<vmem>>, vector<16x128xf32>
    tpu.vector_store %arg7[%c0_7, %c0_8], %10 {strides = array<i32>} : memref<16x128xf32, #tpu.memory_space<vmem>>, vector<16x128xf32>,
    %c0_9 = arith.constant 0 : index
    %c0_10 = arith.constant 0 : index
    %12 = vector.load %arg5[%c0_9, %c0_10] : memref<1x128xf32, #tpu.memory_space<vmem>>, vector<1x128xf32>
    %13 = vector.broadcast %12 : vector<1x128xf32> to vector<16x128xf32>
    %14 = arith.mulf %10, %13 : vector<16x128xf32>
    %c0_11 = arith.constant 0 : index
    %c0_12 = arith.constant 0 : index
    %15 = vector.load %arg8[%c0_11, %c0_12] : memref<16x128xf32, #tpu.memory_space<vmem>>, vector<16x128xf32>
    %c0_13 = arith.constant 0 : index
    %c0_14 = arith.constant 0 : index
    %16 = vector.load %arg6[%c0_13, %c0_14] : memref<128x128xf32, #tpu.memory_space<vmem>>, vector<128x128xf32>
    %cst_15 = arith.constant dense<0.000000e+00> : vector<16x128xf32>
    %17 = tpu.matmul %14, %16, %cst_15 {dimension_numbers = #tpu.dot_dimension_numbers<[1], [0], [0], [1], [0, 0, 1, 1], [], []>} : vector<16x128xf32>, vector<128x128xf32>, vector<16x128xf32> -> vector<16x128xf32>
    %18 = arith.addf %15, %17 : vector<16x128xf32>
    %c0_16 = arith.constant 0 : index
    %c0_17 = arith.constant 0 : index
    %19 = vector.load %arg8[%c0_16, %c0_17] : memref<16x128xf32, #tpu.memory_space<vmem>>, vector<16x128xf32>
    tpu.vector_store %arg8[%c0_16, %c0_17], %18 {strides = array<i32>} : memref<16x128xf32, #tpu.memory_space<vmem>>, vector<16x128xf32>,
    return
  }
  func.func @transform_0(%arg0: i32, %arg1: i32) -> (i32, i32) {
    %c0_i32 = arith.constant 0 : i32
    %c0_i32_0 = arith.constant 0 : i32
    return %arg0, %c0_i32 : i32, i32
  }
  func.func @transform_1(%arg0: i32, %arg1: i32) -> (i32, i32) {
    %c0_i32 = arith.constant 0 : i32
    %c0_i32_0 = arith.constant 0 : i32
    return %c0_i32, %arg1 : i32, i32
  }
  func.func @transform_2(%arg0: i32, %arg1: i32) -> (i32, i32) {
    %c0_i32 = arith.constant 0 : i32
    %c0_i32_0 = arith.constant 0 : i32
    return %c0_i32, %arg1 : i32, i32
  }
  func.func @transform_3(%arg0: i32, %arg1: i32) -> (i32, i32) {
    %c0_i32 = arith.constant 0 : i32
    %c0_i32_0 = arith.constant 0 : i32
    return %c0_i32, %arg1 : i32, i32
  }
  func.func @transform_4(%arg0: i32, %arg1: i32) -> (i32, i32) {
    %c0_i32 = arith.constant 0 : i32
    %c0_i32_0 = arith.constant 0 : i32
    return %arg1, %c0_i32 : i32, i32
  }
  func.func @transform_5(%arg0: i32, %arg1: i32) -> (i32, i32) {
    %c0_i32 = arith.constant 0 : i32
    return %arg0, %arg1 : i32, i32
  }
  func.func @transform_6(%arg0: i32, %arg1: i32) -> (i32, i32) {
    %c0_i32 = arith.constant 0 : i32
    %c0_i32_0 = arith.constant 0 : i32
    return %arg0, %c0_i32 : i32, i32
  }
}

</mosaic_0001>

<llo_original>
// kernel: tpu_custom_call.1
$region0: #{tpu_custom_call.1}
  #allocation0 [shape = 'u32[]', space=smem, size = 0x4, offset = 0x4, fixed_abs, tag = 'smem constant byte address 0x4 - core index']
  #allocation1 [shape = 'u32[144,128]{1,0:T(1,128)}', space=vmem, size = 0x12000, scoped, tag = 'internal scratch']
  %s0 = inlined_call_operand.hbm [shape: f32[16,128], index: 0, kind: input, shape index: {}]
  %s1 = inlined_call_operand.hbm [shape: f32[128,128], index: 1, kind: input, shape index: {}]
  %s2 = inlined_call_operand.vmem [shape: f32[1,128], index: 2, kind: input, shape index: {}]
  %s3 = inlined_call_operand.vmem [shape: f32[1,128], index: 3, kind: input, shape index: {}]
  %s4 = inlined_call_operand.hbm [shape: f32[128,128], index: 4, kind: input, shape index: {}]
  %s5 = inlined_call_operand.hbm [shape: f32[16,128], index: 5, kind: output, shape index: {0}]
  %s6 = inlined_call_operand.hbm [shape: f32[16,128], index: 6, kind: output, shape index: {1}]
  %7 = xla_tuple %s5, %s6
  %s8 = sld [smem:[#allocation0]]
  $region54: #{tpu_custom_call.1} parent=0
    _
  %s10 = ssub.s32 1, %s8
  %s11 = scalar_select 0, %s10, %s8
  $region1: #{tpu_custom_call.1} parent=0
    #allocation2 [shape = 'u8[8192]{0}', space=vmem, size = 0x2000, scoped, tag = 'input window, operand 0, single buffered']
    #allocation3 [shape = 's32[1]{0}', space=sflag, size = 0x4, scoped, tag = 'scoped memory for tpu_custom_call.1']
    #allocation4 [shape = 's32[1]{0}', space=sflag, size = 0x4, scoped, tag = 'scoped memory for tpu_custom_call.1']
    #allocation5 [shape = 'u8[65536]{0}', space=vmem, size = 0x10000, scoped, tag = 'input window, operand 1, single buffered']
    #allocation6 [shape = 's32[1]{0}', space=sflag, size = 0x4, scoped, tag = 'scoped memory for tpu_custom_call.1']
    #allocation7 [shape = 'u8[65536]{0}', space=vmem, size = 0x10000, scoped, tag = 'input window, operand 4, single buffered']
    #allocation8 [shape = 'u8[8192]{0}', space=vmem, size = 0x2000, scoped, tag = 'output window, operand 0, single buffered']
    #allocation9 [shape = 'u8[8192]{0}', space=vmem, size = 0x2000, scoped, tag = 'output window, operand 1, single buffered']
    #allocation10 [shape = 's32[1]{0}', space=sflag, size = 0x4, scoped, tag = 'scoped memory for tpu_custom_call.1']
    %12 = vsyncpa [#allocation3], 0
    %13 = vsyncpa [#allocation6], 0
    %14 = vsyncpa [#allocation4], 0
    %15 = vsyncpa [#allocation10], 0
    // Predicated region
    $region2: #{tpu_custom_call.1} parent=1 // pred_check
      _
    $region3: #{tpu_custom_call.1} parent=1 // pred_check_branch
      %17 = sbr.rel (0) target = $region5
    $region4: #{tpu_custom_call.1} parent=1 // pred_region
      %s19 = ssub.s32 256, 256
      %20 = vsyncadd [#allocation3], %s19
      %s21 = sshll.u32 [#allocation2], 4
      %s22 = int_to_ptr.vmem [resolvable:$true] %s21
      %27 = dma.hbm_to_vmem [thread:$0]  %s0, 256, %s22, [#allocation3], 128, 128, 8
    $region5: #{tpu_custom_call.1} parent=1 // pred_fallthru
      _
    // Predicated region
    $region6: #{tpu_custom_call.1} parent=1 // pred_check
      _
    $region7: #{tpu_custom_call.1} parent=1 // pred_check_branch
      %29 = sbr.rel (0) target = $region9
    $region8: #{tpu_custom_call.1} parent=1 // pred_region
      %s31 = ssub.s32 2048, 2048
      %32 = vsyncadd [#allocation6], %s31
      %s33 = sshll.u32 [#allocation5], 4
      %s34 = int_to_ptr.vmem [resolvable:$true] %s33
      %39 = dma.hbm_to_vmem [thread:$0]  %s1, 2048, %s34, [#allocation6], 128, 128, 8
    $region9: #{tpu_custom_call.1} parent=1 // pred_fallthru
      _
    // Predicated region
    $region10: #{tpu_custom_call.1} parent=1 // pred_check
      _
    $region11: #{tpu_custom_call.1} parent=1 // pred_check_branch
      %41 = sbr.rel (0) target = $region13
    $region12: #{tpu_custom_call.1} parent=1 // pred_region
      _
    $region13: #{tpu_custom_call.1} parent=1 // pred_fallthru
      _
    // Predicated region
    $region14: #{tpu_custom_call.1} parent=1 // pred_check
      _
    $region15: #{tpu_custom_call.1} parent=1 // pred_check_branch
      %43 = sbr.rel (0) target = $region17
    $region16: #{tpu_custom_call.1} parent=1 // pred_region
      _
    $region17: #{tpu_custom_call.1} parent=1 // pred_fallthru
      _
    // Predicated region
    $region18: #{tpu_custom_call.1} parent=1 // pred_check
      _
    $region19: #{tpu_custom_call.1} parent=1 // pred_check_branch
      %45 = sbr.rel (0) target = $region21
    $region20: #{tpu_custom_call.1} parent=1 // pred_region
      %s47 = ssub.s32 2048, 2048
      %48 = vsyncadd [#allocation6], %s47
      %s49 = sshll.u32 [#allocation7], 4
      %s50 = int_to_ptr.vmem [resolvable:$true] %s49
      %55 = dma.hbm_to_vmem [thread:$0]  %s4, 2048, %s50, [#allocation6], 128, 128, 8
    $region21: #{tpu_custom_call.1} parent=1 // pred_fallthru
      _
    // Predicated region
    $region22: #{tpu_custom_call.1} parent=1 // pred_check
      _
    $region23: #{tpu_custom_call.1} parent=1 // pred_check_branch
      %57 = sbr.rel (0) target = $region25
    $region24: #{tpu_custom_call.1} parent=1 // pred_region
      %58 = dma.done [#allocation3], 256
    $region25: #{tpu_custom_call.1} parent=1 // pred_fallthru
      _
    // Predicated region
    $region26: #{tpu_custom_call.1} parent=1 // pred_check
      _
    $region27: #{tpu_custom_call.1} parent=1 // pred_check_branch
      %60 = sbr.rel (0) target = $region29
    $region28: #{tpu_custom_call.1} parent=1 // pred_region
      %61 = dma.done [#allocation6], 2048
    $region29: #{tpu_custom_call.1} parent=1 // pred_fallthru
      _
    // Predicated region
    $region30: #{tpu_custom_call.1} parent=1 // pred_check
      _
    $region31: #{tpu_custom_call.1} parent=1 // pred_check_branch
      %63 = sbr.rel (0) target = $region33
    $region32: #{tpu_custom_call.1} parent=1 // pred_region
      %64 = dma.done [#allocation6], 2048
    $region33: #{tpu_custom_call.1} parent=1 // pred_fallthru
      _
    %p65 = scmp.eq.s32.totalorder 0, 0
    // Predicated region
    $region34: #{tpu_custom_call.1} parent=1 // pred_check
      %p66 = pneg %p65
    $region35: #{tpu_custom_call.1} parent=1 // pred_check_branch
      %68 = sbr.rel (%p66) target = $region37
    $region36: #{tpu_custom_call.1} parent=1 // pred_region
      %69 = vst [vmem:[#allocation9] sm:$0xff] 0.0
      %70 = vst [vmem:[#allocation9 + $0x8] sm:$0xff] 0.0
    $region37: #{tpu_custom_call.1} parent=1 // pred_fallthru
      _
    %v71 = vld [vmem:[#allocation2] sm:$0xff]
    %v72 = vld [vmem:[#allocation2 + $0x8] sm:$0xff]
    %v73 = vld [vmem:[#allocation5] sm:$0xff]
    %v74 = vld [vmem:[#allocation5 + $0x8] sm:$0xff]
    %v75 = vld [vmem:[#allocation5 + $0x10] sm:$0xff]
    %v76 = vld [vmem:[#allocation5 + $0x18] sm:$0xff]
    %v77 = vld [vmem:[#allocation5 + $0x20] sm:$0xff]
    %v78 = vld [vmem:[#allocation5 + $0x28] sm:$0xff]
    %v79 = vld [vmem:[#allocation5 + $0x30] sm:$0xff]
    %v80 = vld [vmem:[#allocation5 + $0x38] sm:$0xff]
    %v81 = vld [vmem:[#allocation5 + $0x40] sm:$0xff]
    %v82 = vld [vmem:[#allocation5 + $0x48] sm:$0xff]
    %v83 = vld [vmem:[#allocation5 + $0x50] sm:$0xff]
    %v84 = vld [vmem:[#allocation5 + $0x58] sm:$0xff]
    %v85 = vld [vmem:[#allocation5 + $0x60] sm:$0xff]
    %v86 = vld [vmem:[#allocation5 + $0x68] sm:$0xff]
    %v87 = vld [vmem:[#allocation5 + $0x70] sm:$0xff]
    %v88 = vld [vmem:[#allocation5 + $0x78] sm:$0xff]
    %v89 = vld [vmem:[%s2] sm:$0x1]
    %v91 = vlaneseq
    %v92 = vshrl.u32 %v91, 7
    %v93 = vsub.s32 0, %v92
    %v94 = vrot.slane %v89, %v93
    %96 = vmatprep.subr.mxu0 0.0
    %97 = vmatpush1.msra.mxu0 %v73
    %98 = vmatprep.subr.mxu0 0.0
    %99 = vmatpush1.msra.mxu0 %v74
    %100 = vmatprep.subr.mxu0 0.0
    %101 = vmatpush1.msra.mxu0 %v75
    %102 = vmatprep.subr.mxu0 0.0
    %103 = vmatpush1.msra.mxu0 %v76
    %104 = vmatprep.subr.mxu0 0.0
    %105 = vmatpush1.msra.mxu0 %v77
    %106 = vmatprep.subr.mxu0 0.0
    %107 = vmatpush1.msra.mxu0 %v78
    %108 = vmatprep.subr.mxu0 0.0
    %109 = vmatpush1.msra.mxu0 %v79
    %110 = vmatprep.subr.mxu0 0.0
    %111 = vmatpush1.msra.mxu0 %v80
    %112 = vmatprep.subr.mxu0 0.0
    %113 = vmatpush1.msra.mxu0 %v81
    %114 = vmatprep.subr.mxu0 0.0
    %115 = vmatpush1.msra.mxu0 %v82
    %116 = vmatprep.subr.mxu0 0.0
    %117 = vmatpush1.msra.mxu0 %v83
    %118 = vmatprep.subr.mxu0 0.0
    %119 = vmatpush1.msra.mxu0 %v84
    %120 = vmatprep.subr.mxu0 0.0
    %121 = vmatpush1.msra.mxu0 %v85
    %122 = vmatprep.subr.mxu0 0.0
    %123 = vmatpush1.msra.mxu0 %v86
    %124 = vmatprep.subr.mxu0 0.0
    %125 = vmatpush1.msra.mxu0 %v87
    %126 = vmatprep.subr.mxu0 0.0
    %127 = vmatpush1.msra.mxu0 %v88
    %128 = vmatprep.subr.mxu0 0.0
    %129 = vmatpush1.msra.mxu0 0.0
    %130 = vmatprep.subr.mxu0 0.0
    %131 = vmatpush1.msra.mxu0 0.0
    %132 = vmatprep.subr.mxu0 0.0
    %133 = vmatpush1.msra.mxu0 0.0
    %134 = vmatprep.subr.mxu0 0.0
    %135 = vmatpush1.msra.mxu0 0.0
    %136 = vmatprep.subr.mxu0 0.0
    %137 = vmatpush1.msra.mxu0 0.0
    %138 = vmatprep.subr.mxu0 0.0
    %139 = vmatpush1.msra.mxu0 0.0
    %140 = vmatprep.subr.mxu0 0.0
    %141 = vmatpush1.msra.mxu0 0.0
    %142 = vmatprep.subr.mxu0 0.0
    %143 = vmatpush1.msra.mxu0 0.0
    %144 = vmatprep.subr.mxu0 0.0
    %145 = vmatpush1.msra.mxu0 0.0
    %146 = vmatprep.subr.mxu0 0.0
    %147 = vmatpush1.msra.mxu0 0.0
    %148 = vmatprep.subr.mxu0 0.0
    %149 = vmatpush1.msra.mxu0 0.0
    %150 = vmatprep.subr.mxu0 0.0
    %151 = vmatpush1.msra.mxu0 0.0
    %152 = vmatprep.subr.mxu0 0.0
    %153 = vmatpush1.msra.mxu0 0.0
    %154 = vmatprep.subr.mxu0 0.0
    %155 = vmatpush1.msra.mxu0 0.0
    %156 = vmatprep.subr.mxu0 0.0
    %157 = vmatpush1.msra.mxu0 0.0
    %158 = vmatprep.subr.mxu0 0.0
    %159 = vmatpush1.msra.mxu0 0.0
    %160 = vmatprep.mubr.f32.mxu0 0.0
    %161 = vmatmul.mubr.f32.gmra.mrb[0].mxu0 %v71
    %v162 = vpop.f32.mrb[0].mxu0
    %v163 = vadd.f32 %v94, %v162
    %v164 = vpop.f32.mrb[0].mxu0
    %165 = vmatprep.mubr.f32.mxu0 0.0
    %166 = vmatmul.mubr.f32.gmra.mrb[0].mxu0 %v72
    %v167 = vpop.f32.mrb[0].mxu0
    %v168 = vadd.f32 %v94, %v167
    %v169 = vpop.f32.mrb[0].mxu0
    %170 = vdwg.mxu0
    %v171 = vmax.f32 %v163, 0.0
    %v172 = vmax.f32 %v168, 0.0
    %173 = vst [vmem:[#allocation8] sm:$0xff] %v171
    %174 = vst [vmem:[#allocation8 + $0x8] sm:$0xff] %v172
    %v175 = vld [vmem:[%s3] sm:$0x1]
    %v177 = vlaneseq
    %v178 = vshrl.u32 %v177, 7
    %v179 = vsub.s32 0, %v178
    %v180 = vrot.slane %v175, %v179
    %v182 = vmul.f32 %v171, %v180
    %v183 = vmul.f32 %v172, %v180
    %v184 = vld [vmem:[#allocation9] sm:$0xff]
    %v185 = vld [vmem:[#allocation9 + $0x8] sm:$0xff]
    %v186 = vld [vmem:[#allocation7] sm:$0xff]
    %v187 = vld [vmem:[#allocation7 + $0x8] sm:$0xff]
    %v188 = vld [vmem:[#allocation7 + $0x10] sm:$0xff]
    %v189 = vld [vmem:[#allocation7 + $0x18] sm:$0xff]
    %v190 = vld [vmem:[#allocation7 + $0x20] sm:$0xff]
    %v191 = vld [vmem:[#allocation7 + $0x28] sm:$0xff]
    %v192 = vld [vmem:[#allocation7 + $0x30] sm:$0xff]
    %v193 = vld [vmem:[#allocation7 + $0x38] sm:$0xff]
    %v194 = vld [vmem:[#allocation7 + $0x40] sm:$0xff]
    %v195 = vld [vmem:[#allocation7 + $0x48] sm:$0xff]
    %v196 = vld [vmem:[#allocation7 + $0x50] sm:$0xff]
    %v197 = vld [vmem:[#allocation7 + $0x58] sm:$0xff]
    %v198 = vld [vmem:[#allocation7 + $0x60] sm:$0xff]
    %v199 = vld [vmem:[#allocation7 + $0x68] sm:$0xff]
    %v200 = vld [vmem:[#allocation7 + $0x70] sm:$0xff]
    %v201 = vld [vmem:[#allocation7 + $0x78] sm:$0xff]
    %202 = vmatprep.subr.mxu0 0.0
    %203 = vmatpush1.msra.mxu0 %v186
    %204 = vmatprep.subr.mxu0 0.0
    %205 = vmatpush1.msra.mxu0 %v187
    %206 = vmatprep.subr.mxu0 0.0
    %207 = vmatpush1.msra.mxu0 %v188
    %208 = vmatprep.subr.mxu0 0.0
    %209 = vmatpush1.msra.mxu0 %v189
    %210 = vmatprep.subr.mxu0 0.0
    %211 = vmatpush1.msra.mxu0 %v190
    %212 = vmatprep.subr.mxu0 0.0
    %213 = vmatpush1.msra.mxu0 %v191
    %214 = vmatprep.subr.mxu0 0.0
    %215 = vmatpush1.msra.mxu0 %v192
    %216 = vmatprep.subr.mxu0 0.0
    %217 = vmatpush1.msra.mxu0 %v193
    %218 = vmatprep.subr.mxu0 0.0
    %219 = vmatpush1.msra.mxu0 %v194
    %220 = vmatprep.subr.mxu0 0.0
    %221 = vmatpush1.msra.mxu0 %v195
    %222 = vmatprep.subr.mxu0 0.0
    %223 = vmatpush1.msra.mxu0 %v196
    %224 = vmatprep.subr.mxu0 0.0
    %225 = vmatpush1.msra.mxu0 %v197
    %226 = vmatprep.subr.mxu0 0.0
    %227 = vmatpush1.msra.mxu0 %v198
    %228 = vmatprep.subr.mxu0 0.0
    %229 = vmatpush1.msra.mxu0 %v199
    %230 = vmatprep.subr.mxu0 0.0
    %231 = vmatpush1.msra.mxu0 %v200
    %232 = vmatprep.subr.mxu0 0.0
    %233 = vmatpush1.msra.mxu0 %v201
    %234 = vmatprep.subr.mxu0 0.0
    %235 = vmatpush1.msra.mxu0 0.0
    %236 = vmatprep.subr.mxu0 0.0
    %237 = vmatpush1.msra.mxu0 0.0
    %238 = vmatprep.subr.mxu0 0.0
    %239 = vmatpush1.msra.mxu0 0.0
    %240 = vmatprep.subr.mxu0 0.0
    %241 = vmatpush1.msra.mxu0 0.0
    %242 = vmatprep.subr.mxu0 0.0
    %243 = vmatpush1.msra.mxu0 0.0
    %244 = vmatprep.subr.mxu0 0.0
    %245 = vmatpush1.msra.mxu0 0.0
    %246 = vmatprep.subr.mxu0 0.0
    %247 = vmatpush1.msra.mxu0 0.0
    %248 = vmatprep.subr.mxu0 0.0
    %249 = vmatpush1.msra.mxu0 0.0
    %250 = vmatprep.subr.mxu0 0.0
    %251 = vmatpush1.msra.mxu0 0.0
    %252 = vmatprep.subr.mxu0 0.0
    %253 = vmatpush1.msra.mxu0 0.0
    %254 = vmatprep.subr.mxu0 0.0
    %255 = vmatpush1.msra.mxu0 0.0
    %256 = vmatprep.subr.mxu0 0.0
    %257 = vmatpush1.msra.mxu0 0.0
    %258 = vmatprep.subr.mxu0 0.0
    %259 = vmatpush1.msra.mxu0 0.0
    %260 = vmatprep.subr.mxu0 0.0
    %261 = vmatpush1.msra.mxu0 0.0
    %262 = vmatprep.subr.mxu0 0.0
    %263 = vmatpush1.msra.mxu0 0.0
    %264 = vmatprep.subr.mxu0 0.0
    %265 = vmatpush1.msra.mxu0 0.0
    %266 = vmatprep.mubr.f32.mxu0 0.0
    %267 = vmatmul.mubr.f32.gmra.mrb[0].mxu0 %v182
    %v268 = vpop.f32.mrb[0].mxu0
    %v269 = vadd.f32 0.0, %v268
    %v270 = vpop.f32.mrb[0].mxu0
    %271 = vmatprep.mubr.f32.mxu0 0.0
    %272 = vmatmul.mubr.f32.gmra.mrb[0].mxu0 %v183
    %v273 = vpop.f32.mrb[0].mxu0
    %v274 = vadd.f32 0.0, %v273
    %v275 = vpop.f32.mrb[0].mxu0
    %276 = vdwg.mxu0
    %v277 = vadd.f32 %v184, %v269
    %v278 = vadd.f32 %v185, %v274
    %279 = vst [vmem:[#allocation9] sm:$0xff] %v277
    %280 = vst [vmem:[#allocation9 + $0x8] sm:$0xff] %v278
    // Predicated region
    $region38: #{tpu_custom_call.1} parent=1 // pred_check
      _
    $region39: #{tpu_custom_call.1} parent=1 // pred_check_branch
      %282 = sbr.rel (0) target = $region41
    $region40: #{tpu_custom_call.1} parent=1 // pred_region
      %s284 = ssub.s32 256, 256
      %285 = vsyncadd [#allocation4], %s284
      %s286 = sshll.u32 [#allocation8], 4
      %s287 = int_to_ptr.vmem [resolvable:$true] %s286
      %292 = dma.vmem_to_hbm [thread:$0]  %s287, 256, %s5, [#allocation4], 128, 128, 8
    $region41: #{tpu_custom_call.1} parent=1 // pred_fallthru
      _
    // Predicated region
    $region42: #{tpu_custom_call.1} parent=1 // pred_check
      _
    $region43: #{tpu_custom_call.1} parent=1 // pred_check_branch
      %294 = sbr.rel (0) target = $region45
    $region44: #{tpu_custom_call.1} parent=1 // pred_region
      %s296 = ssub.s32 256, 256
      %297 = vsyncadd [#allocation10], %s296
      %s298 = sshll.u32 [#allocation9], 4
      %s299 = int_to_ptr.vmem [resolvable:$true] %s298
      %304 = dma.vmem_to_hbm [thread:$0]  %s299, 256, %s6, [#allocation10], 128, 128, 8
    $region45: #{tpu_custom_call.1} parent=1 // pred_fallthru
      _
    // Predicated region
    $region46: #{tpu_custom_call.1} parent=1 // pred_check
      _
    $region47: #{tpu_custom_call.1} parent=1 // pred_check_branch
      %306 = sbr.rel (0) target = $region49
    $region48: #{tpu_custom_call.1} parent=1 // pred_region
      %307 = dma.done [#allocation4], 256
    $region49: #{tpu_custom_call.1} parent=1 // pred_fallthru
      _
    // Predicated region
    $region50: #{tpu_custom_call.1} parent=1 // pred_check
      _
    $region51: #{tpu_custom_call.1} parent=1 // pred_check_branch
      %309 = sbr.rel (0) target = $region53
    $region52: #{tpu_custom_call.1} parent=1 // pred_region
      %310 = dma.done [#allocation10], 256
    $region53: #{tpu_custom_call.1} parent=1 // pred_fallthru
      _
    %311 = vsyncpa [#allocation3], 1
    %312 = vsyncpa [#allocation6], 1
    %313 = vsyncpa [#allocation4], 1
    %314 = vsyncpa [#allocation10], 1

</llo_original>
